<compile_context>
chip_gen: v6e
topology: v6e:2x2x1
jax: 0.10.0
libtpu: 0.0.40
codegen_flags: <defaults>
</compile_context>

<pallas_src>
import functools

import jax
import jax.numpy as jnp
from jax.experimental import pallas as pl
from jax.experimental.pallas import tpu as pltpu


HIDDEN = 32       # FeedForward inner size (synthetic small MLP)
N_IN = 2          # input labels: ['x', 'y']
N_OUT = 8         # output labels: ['vx', 'vy', 'p', 'ux', 'uy', 'r', 'zx', 'zy']


def _round_up(n, m):
    return -(-n // m) * m


def strong_net_kernel(xT_ref, w1t_ref, b1_ref, w2t_ref, b2_ref, w3t_ref, b3_ref, o_ref):
    """Fused MLP forward + hard-boundary-constraint epilogue, feature-major layout.

    xT_ref  : (2, tn)   input coordinates, batch on lanes
    w1t_ref : (H, 2)    W1^T          b1_ref : (H, 1)
    w2t_ref : (H, H)    W2^T          b2_ref : (H, 1)
    w3t_ref : (8, H)    W3^T          b3_ref : (8, 1)
    o_ref   : (8, tn)   constrained outputs, batch on lanes
    """
    xc = xT_ref[0:1, :]                                # (1, tn)  'x' coordinate
    yc = xT_ref[1:2, :]                                # (1, tn)  'y' coordinate

    # --- layer 1: K=2, done on the VPU as two broadcast FMAs (avoid degenerate MXU) ---
    # (Optional micro-opt: stride-0 sublane-broadcast loads of x/y; kept as plain
    #  arithmetic broadcasts here for lowering robustness — the win is a few % at most.)
    h = jnp.tanh(
        w1t_ref[:, 0:1] * xc + w1t_ref[:, 1:2] * yc + b1_ref[...]
    )                                                  # (H, tn)

    # --- layer 2: HxH on the MXU, lane-dense N=tn ---
    h = jnp.tanh(
        jnp.dot(w2t_ref[...], h, preferred_element_type=jnp.float32) + b2_ref[...]
    )                                                  # (H, tn)

    # --- layer 3: Hx8 on the MXU ---
    out = (
        jnp.dot(w3t_ref[...], h, preferred_element_type=jnp.float32) + b3_ref[...]
    )                                                  # (8, tn)

    # --- hard-constraint epilogue: one full-tile VPU FMA + one unmasked store ---
    g = (2.0 - yc) * xc * yc                           # (1, tn)
    g1 = g * (1.0 - xc)                                # (1, tn)
    ones = jnp.ones_like(g)
    zeros = jnp.zeros_like(g)
    # output rows ordered [vx, vy, p, ux, uy, r, zx, zy]
    gmat = jnp.concatenate([g, g1, ones, g, g1, ones, g, g1], axis=0)          # (8, tn)
    addmat = jnp.concatenate(
        [yc, zeros, zeros, zeros, zeros, zeros, zeros, zeros], axis=0)         # (8, tn)
    o_ref[...] = (out * gmat + addmat).astype(o_ref.dtype)


@functools.partial(jax.jit, static_argnames=("tn",))
def strong_net_feature_major(xT, w1, b1, w2, b2, w3, b3, *, tn=4096):
    """Feature-major fast path: xT (2, N) -> (8, N).  No wrapper-side transposes.

    Use this entry point when the consumer can take feature-major outputs; it avoids
    the extra HBM passes of the (N,2)<->(2,N)/(N,8)<->(8,N) transposes entirely.
    """
    N = xT.shape[1]
    H = w1.shape[1]

    # Effective lane tile: as large as possible to amortize the ~0.35 us per-grid-step
    # overhead, but keep >= ~4 "parallel" grid steps so both v7x TensorCores get work.
    tn_eff = max(128, min(tn, _round_up(pl.cdiv(N, 4), 128)))
    n_pad = _round_up(N, tn_eff)
    if n_pad != N:
        xT = jnp.pad(xT, ((0, 0), (0, n_pad - N)))     # pad-and-slice for ragged batches

    # feature-major views of parameters (tiny, layout plumbing only)
    w1t = w1.T                        # (H, 2)
    w2t = w2.T                        # (H, H)
    w3t = w3.T                        # (8, H)
    b1t = jnp.reshape(b1, (-1, 1))    # (H, 1)
    b2t = jnp.reshape(b2, (-1, 1))    # (H, 1)
    b3t = jnp.reshape(b3, (-1, 1))    # (8, 1)

    const = lambda shape: pl.BlockSpec(shape, lambda i: (0,) * len(shape))

    flops = n_pad * (2 * N_IN * H + 2 * H * H + 2 * H * N_OUT + 4 * N_OUT + 8)
    transcendentals = 2 * n_pad * H
    bytes_accessed = 4 * (n_pad * (N_IN + N_OUT)
                          + N_IN * H + H * H + H * N_OUT + 2 * H + N_OUT)

    outT = pl.pallas_call(
        strong_net_kernel,
        out_shape=jax.ShapeDtypeStruct((N_OUT, n_pad), jnp.float32),
        grid_spec=pltpu.PrefetchScalarGridSpec(
            num_scalar_prefetch=0,
            grid=(n_pad // tn_eff,),
            in_specs=[
                pl.BlockSpec((N_IN, tn_eff), lambda i: (0, i)),   # x (feature-major tile)
                const((H, N_IN)),                                 # W1^T
                const((H, 1)),                                    # b1
                const((H, H)),                                    # W2^T
                const((H, 1)),                                    # b2
                const((N_OUT, H)),                                # W3^T
                const((N_OUT, 1)),                                # b3
            ],
            out_specs=pl.BlockSpec((N_OUT, tn_eff), lambda i: (0, i)),
        ),
        compiler_params=pltpu.CompilerParams(
            dimension_semantics=("parallel",),
        ),
        cost_estimate=pl.CostEstimate(
            flops=flops,
            transcendentals=transcendentals,
            bytes_accessed=bytes_accessed,
        ),
    )(xT, w1t, b1t, w2t, b2t, w3t, b3t)

    if n_pad != N:
        outT = outT[:, :N]
    return outT                                         # (8, N)


@functools.partial(jax.jit, static_argnames=("tn",))
def strong_net(x, w1, b1, w2, b2, w3, b3, *, tn=4096):
    """PyTorch-interface-compatible wrapper: x (N, 2) -> (N, 8) row-major.

    Prefer `strong_net_feature_major` when the consumer can accept (8, N): the
    transposes here are separate XLA HBM passes kept only for interface parity.
    """
    outT = strong_net_feature_major(x.T, w1, b1, w2, b2, w3, b3, tn=tn)
    return outT.T                                       # (N, 8)


def strong_net_reference(x, w1, b1, w2, b2, w3, b3):
    """Pure-JAX reference matching the PyTorch forward semantics."""
    h = jnp.tanh(x @ w1 + b1)
    h = jnp.tanh(h @ w2 + b2)
    out = h @ w3 + b3
    xc, yc = x[:, 0:1], x[:, 1:2]
    g = (2.0 - yc) * xc * yc
    g1 = g * (1.0 - xc)
    vx = yc + out[:, 0:1] * g
    vy = out[:, 1:2] * g1
    p = out[:, 2:3]
    ux = out[:, 3:4] * g
    uy = out[:, 4:5] * g1
    r = out[:, 5:6]
    zx = out[:, 6:7] * g
    zy = out[:, 7:8] * g1
    return jnp.concatenate([vx, vy, p, ux, uy, r, zx, zy], axis=1)


if __name__ == "__main__":
    key = jax.random.PRNGKey(0)
    k_x, k_w1, k_b1, k_w2, k_b2, k_w3, k_b3 = jax.random.split(key, 7)

    N = 2048          # small batch of collocation points -> >= 4 parallel grid steps

    # input coordinates in a physically sensible range (x in [0,1], y in [0,2])
    u = jax.random.uniform(k_x, (N, N_IN), dtype=jnp.float32)
    x = jnp.stack([u[:, 0], 2.0 * u[:, 1]], axis=1)

    # deterministic synthetic FeedForward parameters (Glorot-ish scale)
    def init(k, shape, fan_in):
        return (jax.random.normal(k, shape, dtype=jnp.float32)
                / jnp.sqrt(jnp.float32(fan_in)))

    w1 = init(k_w1, (N_IN, HIDDEN), N_IN)
    b1 = init(k_b1, (1, HIDDEN), HIDDEN) * 0.1
    w2 = init(k_w2, (HIDDEN, HIDDEN), HIDDEN)
    b2 = init(k_b2, (1, HIDDEN), HIDDEN) * 0.1
    w3 = init(k_w3, (HIDDEN, N_OUT), HIDDEN)
    b3 = init(k_b3, (1, N_OUT), N_OUT) * 0.1

    ref = strong_net_reference(x, w1, b1, w2, b2, w3, b3)

    # 1) interface-compatible path: (N, 2) -> (N, 8)
    out = jax.block_until_ready(strong_net(x, w1, b1, w2, b2, w3, b3))
    assert out.shape == (N, N_OUT)
    assert jnp.allclose(out, ref, atol=1e-5, rtol=1e-5), "row-major path mismatch"

    # 2) feature-major fast path (no wrapper transposes): (2, N) -> (8, N)
    outT = jax.block_until_ready(
        strong_net_feature_major(x.T, w1, b1, w2, b2, w3, b3))
    assert outT.shape == (N_OUT, N)
    assert jnp.allclose(outT, ref.T, atol=1e-5, rtol=1e-5), "feature-major path mismatch"

    # 3) ragged batch (pad-and-slice inside the wrapper)
    Nr = 1000
    out_r = jax.block_until_ready(strong_net(x[:Nr], w1, b1, w2, b2, w3, b3))
    assert out_r.shape == (Nr, N_OUT)
    assert jnp.allclose(out_r, ref[:Nr], atol=1e-5, rtol=1e-5), "ragged path mismatch"

    print("KERNEL_OK")
</pallas_src>

<mosaic_0001>
module attributes {stable_mosaic.version = 11 : i64} {
  func.func @strong_net_kernel(%arg0: i32, %arg1: memref<2x512xf32, #tpu.memory_space<vmem>>, %arg2: memref<32x2xf32, #tpu.memory_space<vmem>>, %arg3: memref<32x1xf32, #tpu.memory_space<vmem>>, %arg4: memref<32x32xf32, #tpu.memory_space<vmem>>, %arg5: memref<32x1xf32, #tpu.memory_space<vmem>>, %arg6: memref<8x32xf32, #tpu.memory_space<vmem>>, %arg7: memref<8x1xf32, #tpu.memory_space<vmem>>, %arg8: memref<8x512xf32, #tpu.memory_space<vmem>>) attributes {dimension_semantics = [#tpu.dimension_semantics<parallel>], iteration_bounds = array<i64: 4>, scalar_prefetch = 0 : i64, scratch_operands = 0 : i64, tpu.core_type = #tpu.core_type<tc>, window_params = [{transform_indices = @transform_0, window_bounds = array<i64: 2, 512>}, {pipeline_mode = #tpu.pipeline_mode<synchronous>, transform_indices = @transform_1, window_bounds = array<i64: 32, 2>}, {pipeline_mode = #tpu.pipeline_mode<synchronous>, transform_indices = @transform_2, window_bounds = array<i64: 32, 1>}, {pipeline_mode = #tpu.pipeline_mode<synchronous>, transform_indices = @transform_3, window_bounds = array<i64: 32, 32>}, {pipeline_mode = #tpu.pipeline_mode<synchronous>, transform_indices = @transform_4, window_bounds = array<i64: 32, 1>}, {pipeline_mode = #tpu.pipeline_mode<synchronous>, transform_indices = @transform_5, window_bounds = array<i64: 8, 32>}, {pipeline_mode = #tpu.pipeline_mode<synchronous>, transform_indices = @transform_6, window_bounds = array<i64: 8, 1>}, {transform_indices = @transform_7, window_bounds = array<i64: 8, 512>}]} {
    %c0 = arith.constant 0 : index
    %c0_0 = arith.constant 0 : index
    %0 = vector.load %arg1[%c0, %c0_0] : memref<2x512xf32, #tpu.memory_space<vmem>>, vector<1x512xf32>
    %c1 = arith.constant 1 : index
    %c0_1 = arith.constant 0 : index
    %1 = vector.load %arg1[%c1, %c0_1] : memref<2x512xf32, #tpu.memory_space<vmem>>, vector<1x512xf32>
    %c0_2 = arith.constant 0 : index
    %c0_3 = arith.constant 0 : index
    %2 = vector.load %arg2[%c0_2, %c0_3] : memref<32x2xf32, #tpu.memory_space<vmem>>, vector<32x1xf32>
    %3 = vector.broadcast %2 : vector<32x1xf32> to vector<32x512xf32>
    %4 = vector.broadcast %0 : vector<1x512xf32> to vector<32x512xf32>
    %5 = arith.mulf %3, %4 : vector<32x512xf32>
    %c0_4 = arith.constant 0 : index
    %c1_5 = arith.constant 1 : index
    %6 = vector.load %arg2[%c0_4, %c1_5] : memref<32x2xf32, #tpu.memory_space<vmem>>, vector<32x1xf32>
    %7 = vector.broadcast %6 : vector<32x1xf32> to vector<32x512xf32>
    %8 = vector.broadcast %1 : vector<1x512xf32> to vector<32x512xf32>
    %9 = arith.mulf %7, %8 : vector<32x512xf32>
    %10 = arith.addf %5, %9 : vector<32x512xf32>
    %c0_6 = arith.constant 0 : index
    %c0_7 = arith.constant 0 : index
    %11 = vector.load %arg3[%c0_6, %c0_7] : memref<32x1xf32, #tpu.memory_space<vmem>>, vector<32x1xf32>
    %12 = vector.broadcast %11 : vector<32x1xf32> to vector<32x512xf32>
    %13 = arith.addf %10, %12 : vector<32x512xf32>
    %14 = math.tanh %13 : vector<32x512xf32>
    %c0_8 = arith.constant 0 : index
    %c0_9 = arith.constant 0 : index
    %15 = vector.load %arg4[%c0_8, %c0_9] : memref<32x32xf32, #tpu.memory_space<vmem>>, vector<32x32xf32>
    %cst = arith.constant dense<0.000000e+00> : vector<32x512xf32>
    %16 = tpu.matmul %15, %14, %cst {dimension_numbers = #tpu.dot_dimension_numbers<[1], [0], [0], [1], [0, 0, 1, 1], [], []>} : vector<32x32xf32>, vector<32x512xf32>, vector<32x512xf32> -> vector<32x512xf32>
    %c0_10 = arith.constant 0 : index
    %c0_11 = arith.constant 0 : index
    %17 = vector.load %arg5[%c0_10, %c0_11] : memref<32x1xf32, #tpu.memory_space<vmem>>, vector<32x1xf32>
    %18 = vector.broadcast %17 : vector<32x1xf32> to vector<32x512xf32>
    %19 = arith.addf %16, %18 : vector<32x512xf32>
    %20 = math.tanh %19 : vector<32x512xf32>
    %c0_12 = arith.constant 0 : index
    %c0_13 = arith.constant 0 : index
    %21 = vector.load %arg6[%c0_12, %c0_13] : memref<8x32xf32, #tpu.memory_space<vmem>>, vector<8x32xf32>
    %cst_14 = arith.constant dense<0.000000e+00> : vector<8x512xf32>
    %22 = tpu.matmul %21, %20, %cst_14 {dimension_numbers = #tpu.dot_dimension_numbers<[1], [0], [0], [1], [0, 0, 1, 1], [], []>} : vector<8x32xf32>, vector<32x512xf32>, vector<8x512xf32> -> vector<8x512xf32>
    %c0_15 = arith.constant 0 : index
    %c0_16 = arith.constant 0 : index
    %23 = vector.load %arg7[%c0_15, %c0_16] : memref<8x1xf32, #tpu.memory_space<vmem>>, vector<8x1xf32>
    %24 = vector.broadcast %23 : vector<8x1xf32> to vector<8x512xf32>
    %25 = arith.addf %22, %24 : vector<8x512xf32>
    %cst_17 = arith.constant 2.000000e+00 : f32
    %26 = vector.broadcast %cst_17 : f32 to vector<1x512xf32>
    %27 = arith.subf %26, %1 : vector<1x512xf32>
    %28 = arith.mulf %27, %0 : vector<1x512xf32>
    %29 = arith.mulf %28, %1 : vector<1x512xf32>
    %cst_18 = arith.constant 1.000000e+00 : f32
    %30 = vector.broadcast %cst_18 : f32 to vector<1x512xf32>
    %31 = arith.subf %30, %0 : vector<1x512xf32>
    %32 = arith.mulf %29, %31 : vector<1x512xf32>
    %cst_19 = arith.constant 1.000000e+00 : f32
    %33 = vector.broadcast %cst_19 : f32 to vector<1x512xf32>
    %cst_20 = arith.constant 0.000000e+00 : f32
    %34 = vector.broadcast %cst_20 : f32 to vector<1x512xf32>
    %35 = tpu.concatenate %29, %32, %33, %29, %32, %33, %29, %32 in 0 : vector<1x512xf32>, vector<1x512xf32>, vector<1x512xf32>, vector<1x512xf32>, vector<1x512xf32>, vector<1x512xf32>, vector<1x512xf32>, vector<1x512xf32> -> vector<8x512xf32>
    %36 = tpu.concatenate %1, %34, %34, %34, %34, %34, %34, %34 in 0 : vector<1x512xf32>, vector<1x512xf32>, vector<1x512xf32>, vector<1x512xf32>, vector<1x512xf32>, vector<1x512xf32>, vector<1x512xf32>, vector<1x512xf32> -> vector<8x512xf32>
    %37 = arith.mulf %25, %35 : vector<8x512xf32>
    %38 = arith.addf %37, %36 : vector<8x512xf32>
    %c0_21 = arith.constant 0 : index
    %c0_22 = arith.constant 0 : index
    %39 = vector.load %arg8[%c0_21, %c0_22] : memref<8x512xf32, #tpu.memory_space<vmem>>, vector<8x512xf32>
    tpu.vector_store %arg8[%c0_21, %c0_22], %38 {strides = array<i32>} : memref<8x512xf32, #tpu.memory_space<vmem>>, vector<8x512xf32>,
    return
  }
  func.func @transform_0(%arg0: i32) -> (i32, i32) {
    %c0_i32 = arith.constant 0 : i32
    %c0_i32_0 = arith.constant 0 : i32
    return %c0_i32, %arg0 : i32, i32
  }
  func.func @transform_1(%arg0: i32) -> (i32, i32) {
    %c0_i32 = arith.constant 0 : i32
    %c0_i32_0 = arith.constant 0 : i32
    %c0_i32_1 = arith.constant 0 : i32
    return %c0_i32, %c0_i32_0 : i32, i32
  }
  func.func @transform_2(%arg0: i32) -> (i32, i32) {
    %c0_i32 = arith.constant 0 : i32
    %c0_i32_0 = arith.constant 0 : i32
    %c0_i32_1 = arith.constant 0 : i32
    return %c0_i32, %c0_i32_0 : i32, i32
  }
  func.func @transform_3(%arg0: i32) -> (i32, i32) {
    %c0_i32 = arith.constant 0 : i32
    %c0_i32_0 = arith.constant 0 : i32
    %c0_i32_1 = arith.constant 0 : i32
    return %c0_i32, %c0_i32_0 : i32, i32
  }
  func.func @transform_4(%arg0: i32) -> (i32, i32) {
    %c0_i32 = arith.constant 0 : i32
    %c0_i32_0 = arith.constant 0 : i32
    %c0_i32_1 = arith.constant 0 : i32
    return %c0_i32, %c0_i32_0 : i32, i32
  }
  func.func @transform_5(%arg0: i32) -> (i32, i32) {
    %c0_i32 = arith.constant 0 : i32
    %c0_i32_0 = arith.constant 0 : i32
    %c0_i32_1 = arith.constant 0 : i32
    return %c0_i32, %c0_i32_0 : i32, i32
  }
  func.func @transform_6(%arg0: i32) -> (i32, i32) {
    %c0_i32 = arith.constant 0 : i32
    %c0_i32_0 = arith.constant 0 : i32
    %c0_i32_1 = arith.constant 0 : i32
    return %c0_i32, %c0_i32_0 : i32, i32
  }
  func.func @transform_7(%arg0: i32) -> (i32, i32) {
    %c0_i32 = arith.constant 0 : i32
    %c0_i32_0 = arith.constant 0 : i32
    return %c0_i32, %arg0 : i32, i32
  }
}

</mosaic_0001>

<llo_original>
// kernel: strong_net_feature_major.1
$region0: #{strong_net_feature_major.1}
  #allocation0 [shape = 'u32[]', space=smem, size = 0x4, offset = 0x4, fixed_abs, tag = 'smem constant byte address 0x4 - core index']
  #allocation1 [shape = 'u32[144,128]{1,0:T(1,128)}', space=vmem, size = 0x12000, scoped, tag = 'internal scratch']
  %s0 = inlined_call_operand.vmem [shape: f32[2,2048], index: 0, kind: input, shape index: {}]
  %s1 = inlined_call_operand.vmem [shape: f32[32,2], index: 1, kind: input, shape index: {}]
  %s2 = inlined_call_operand.vmem [shape: f32[32,1], index: 2, kind: input, shape index: {}]
  %s3 = inlined_call_operand.vmem [shape: f32[32,32], index: 3, kind: input, shape index: {}]
  %s4 = inlined_call_operand.vmem [shape: f32[32,1], index: 4, kind: input, shape index: {}]
  %s5 = inlined_call_operand.vmem [shape: f32[8,32], index: 5, kind: input, shape index: {}]
  %s6 = inlined_call_operand.vmem [shape: f32[8,1], index: 6, kind: input, shape index: {}]
  %s7 = inlined_call_operand.hbm [shape: f32[8,2048], index: 7, kind: output, shape index: {}]
  %s8 = sld [smem:[#allocation0]]
  $region61: #{strong_net_feature_major.1} parent=0
    _
  %s10 = ssub.s32 1, %s8
  %s11 = scalar_select 0, %s10, %s8
  $region1: #{strong_net_feature_major.1} parent=0
    #allocation2 [shape = 'u8[32768]{0}', space=vmem, size = 0x8000, scoped, tag = 'output window, operand 0']
    #allocation3 [shape = 's32[2]{0}', space=sflag, size = 0x8, scoped, tag = 'scoped memory for strong_net_feature_major.1']
    %12 = vsyncpa [#allocation3], 0
    %s13 = scalar_lea.sflag [#allocation3], 1
    %14 = vsyncpa %s13, 0
    loop: start=0, step=1, limit=6
    $region2: #{strong_net_feature_major.1} parent=1 // loop_pre_header
      _
    $region3: #{strong_net_feature_major.1} parent=1 // loop_header
      %s16 = sphi 0, %s20
      %p17 = scmp.ge.s32.totalorder %s16, 6
      %s26 = sphi 0, %s28
      %s29 = sphi 0, %s26
      %s30 = sphi 0, %s29
      %s46 = sphi 0, %s30
      %s50 = sphi 0, %s50
      %s52 = sphi 0, %s50
      %s53 = sphi 0, %s52
      %s67 = sphi 0, %s53
      %s71 = sphi 0, %s71
      %s73 = sphi 0, %s71
      %s74 = sphi 0, %s73
      %s88 = sphi 0, %s74
      %s92 = sphi 0, %s92
      %s94 = sphi 0, %s92
      %s95 = sphi 0, %s94
      %s109 = sphi 0, %s95
      %s113 = sphi 0, %s113
      %s115 = sphi 0, %s113
      %s116 = sphi 0, %s115
      %s130 = sphi 0, %s116
      %s134 = sphi 0, %s134
      %s136 = sphi 0, %s134
      %s137 = sphi 0, %s136
      %s151 = sphi 0, %s137
      %s155 = sphi 0, %s155
      %s157 = sphi 0, %s155
      %s158 = sphi 0, %s157
      %s172 = sphi 0, %s158
      %s178 = sphi 0, %s180
      %s181 = sphi 0, %s178
      %s182 = sphi 0, %s181
      %s198 = sphi 0, %s182
    $region4: #{strong_net_feature_major.1} parent=1 // loop_header_branch
      %19 = sbr.rel (%p17) target = $region8
    $region5: #{strong_net_feature_major.1} parent=1 // loop_body
      %s21 = ssub.s32 %s16, 1
      %s22 = ssub.s32 %s16, 2
      %s23 = sadd.s32 %s16, 1
      %s24 = ssub.s32 %s16, %s23
      %p25 = scmp.eq.s32.totalorder %s24, 0
      %s27 = sadd.s32 %s26, 1
      %s28 = scalar_select %p25, %s26, %s27
      %p31 = pneg %p25
      %p32 = scmp.eq.s32.totalorder %s16, 3
      %p33 = por %p31, %p32
      %p34 = scmp.ne.s32.totalorder %s26, %s29
      %p35 = scmp.eq.s32.totalorder %s16, 0
      %p36 = por %p34, %p35
      %p37 = scmp.ne.s32.totalorder %s26, %s29
      %p38 = scmp.eq.s32.totalorder %s21, 3
      %p39 = por %p37, %p38
      %p40 = scmp.ne.s32.totalorder %s29, %s30
      %p41 = scmp.eq.s32.totalorder %s21, 0
      %p42 = por %p40, %p41
      %p43 = scmp.ne.s32.totalorder %s29, %s30
      %p44 = scmp.eq.s32.totalorder %s22, 3
      %p45 = por %p43, %p44
      %p47 = scmp.ne.s32.totalorder %s30, %s46
      %p48 = scmp.eq.s32.totalorder %s22, 0
      %p49 = por %p47, %p48
      %s51 = sadd.s32 %s50, 1
      %p54 = scmp.eq.s32.totalorder %s16, 3
      %p55 = scmp.ne.s32.totalorder %s50, %s52
      %p56 = scmp.eq.s32.totalorder %s16, 0
      %p57 = por %p55, %p56
      %p58 = scmp.ne.s32.totalorder %s50, %s52
      %p59 = scmp.eq.s32.totalorder %s21, 3
      %p60 = por %p58, %p59
      %p61 = scmp.ne.s32.totalorder %s52, %s53
      %p62 = scmp.eq.s32.totalorder %s21, 0
      %p63 = por %p61, %p62
      %p64 = scmp.ne.s32.totalorder %s52, %s53
      %p65 = scmp.eq.s32.totalorder %s22, 3
      %p66 = por %p64, %p65
      %p68 = scmp.ne.s32.totalorder %s53, %s67
      %p69 = scmp.eq.s32.totalorder %s22, 0
      %p70 = por %p68, %p69
      %s72 = sadd.s32 %s71, 1
      %p75 = scmp.eq.s32.totalorder %s16, 3
      %p76 = scmp.ne.s32.totalorder %s71, %s73
      %p77 = scmp.eq.s32.totalorder %s16, 0
      %p78 = por %p76, %p77
      %p79 = scmp.ne.s32.totalorder %s71, %s73
      %p80 = scmp.eq.s32.totalorder %s21, 3
      %p81 = por %p79, %p80
      %p82 = scmp.ne.s32.totalorder %s73, %s74
      %p83 = scmp.eq.s32.totalorder %s21, 0
      %p84 = por %p82, %p83
      %p85 = scmp.ne.s32.totalorder %s73, %s74
      %p86 = scmp.eq.s32.totalorder %s22, 3
      %p87 = por %p85, %p86
      %p89 = scmp.ne.s32.totalorder %s74, %s88
      %p90 = scmp.eq.s32.totalorder %s22, 0
      %p91 = por %p89, %p90
      %s93 = sadd.s32 %s92, 1
      %p96 = scmp.eq.s32.totalorder %s16, 3
      %p97 = scmp.ne.s32.totalorder %s92, %s94
      %p98 = scmp.eq.s32.totalorder %s16, 0
      %p99 = por %p97, %p98
      %p100 = scmp.ne.s32.totalorder %s92, %s94
      %p101 = scmp.eq.s32.totalorder %s21, 3
      %p102 = por %p100, %p101
      %p103 = scmp.ne.s32.totalorder %s94, %s95
      %p104 = scmp.eq.s32.totalorder %s21, 0
      %p105 = por %p103, %p104
      %p106 = scmp.ne.s32.totalorder %s94, %s95
      %p107 = scmp.eq.s32.totalorder %s22, 3
      %p108 = por %p106, %p107
      %p110 = scmp.ne.s32.totalorder %s95, %s109
      %p111 = scmp.eq.s32.totalorder %s22, 0
      %p112 = por %p110, %p111
      %s114 = sadd.s32 %s113, 1
      %p117 = scmp.eq.s32.totalorder %s16, 3
      %p118 = scmp.ne.s32.totalorder %s113, %s115
      %p119 = scmp.eq.s32.totalorder %s16, 0
      %p120 = por %p118, %p119
      %p121 = scmp.ne.s32.totalorder %s113, %s115
      %p122 = scmp.eq.s32.totalorder %s21, 3
      %p123 = por %p121, %p122
      %p124 = scmp.ne.s32.totalorder %s115, %s116
      %p125 = scmp.eq.s32.totalorder %s21, 0
      %p126 = por %p124, %p125
      %p127 = scmp.ne.s32.totalorder %s115, %s116
      %p128 = scmp.eq.s32.totalorder %s22, 3
      %p129 = por %p127, %p128
      %p131 = scmp.ne.s32.totalorder %s116, %s130
      %p132 = scmp.eq.s32.totalorder %s22, 0
      %p133 = por %p131, %p132
      %s135 = sadd.s32 %s134, 1
      %p138 = scmp.eq.s32.totalorder %s16, 3
      %p139 = scmp.ne.s32.totalorder %s134, %s136
      %p140 = scmp.eq.s32.totalorder %s16, 0
      %p141 = por %p139, %p140
      %p142 = scmp.ne.s32.totalorder %s134, %s136
      %p143 = scmp.eq.s32.totalorder %s21, 3
      %p144 = por %p142, %p143
      %p145 = scmp.ne.s32.totalorder %s136, %s137
      %p146 = scmp.eq.s32.totalorder %s21, 0
      %p147 = por %p145, %p146
      %p148 = scmp.ne.s32.totalorder %s136, %s137
      %p149 = scmp.eq.s32.totalorder %s22, 3
      %p150 = por %p148, %p149
      %p152 = scmp.ne.s32.totalorder %s137, %s151
      %p153 = scmp.eq.s32.totalorder %s22, 0
      %p154 = por %p152, %p153
      %s156 = sadd.s32 %s155, 1
      %p159 = scmp.eq.s32.totalorder %s16, 3
      %p160 = scmp.ne.s32.totalorder %s155, %s157
      %p161 = scmp.eq.s32.totalorder %s16, 0
      %p162 = por %p160, %p161
      %p163 = scmp.ne.s32.totalorder %s155, %s157
      %p164 = scmp.eq.s32.totalorder %s21, 3
      %p165 = por %p163, %p164
      %p166 = scmp.ne.s32.totalorder %s157, %s158
      %p167 = scmp.eq.s32.totalorder %s21, 0
      %p168 = por %p166, %p167
      %p169 = scmp.ne.s32.totalorder %s157, %s158
      %p170 = scmp.eq.s32.totalorder %s22, 3
      %p171 = por %p169, %p170
      %p173 = scmp.ne.s32.totalorder %s158, %s172
      %p174 = scmp.eq.s32.totalorder %s22, 0
      %p175 = por %p173, %p174
      %s176 = ssub.s32 %s16, %s23
      %p177 = scmp.eq.s32.totalorder %s176, 0
      %s179 = sadd.s32 %s178, 1
      %s180 = scalar_select %p177, %s178, %s179
      %p183 = pneg %p177
      %p184 = scmp.eq.s32.totalorder %s16, 3
      %p185 = por %p183, %p184
      %p186 = scmp.ne.s32.totalorder %s178, %s181
      %p187 = scmp.eq.s32.totalorder %s16, 0
      %p188 = por %p186, %p187
      %p189 = scmp.ne.s32.totalorder %s178, %s181
      %p190 = scmp.eq.s32.totalorder %s21, 3
      %p191 = por %p189, %p190
      %p192 = scmp.ne.s32.totalorder %s181, %s182
      %p193 = scmp.eq.s32.totalorder %s21, 0
      %p194 = por %p192, %p193
      %p195 = scmp.ne.s32.totalorder %s181, %s182
      %p196 = scmp.eq.s32.totalorder %s22, 3
      %p197 = por %p195, %p196
      %p199 = scmp.ne.s32.totalorder %s182, %s198
      %p200 = scmp.eq.s32.totalorder %s22, 0
      %p201 = por %p199, %p200
      %p202 = scmp.le.s32.totalorder 1, %s16
      %p203 = scmp.lt.s32.totalorder %s16, 5
      %p204 = pnand %p202, %p203
      %p205 = pneg %p204
      // Predicated region
      $region9: #{strong_net_feature_major.1} parent=5 // pred_check
        _
      $region10: #{strong_net_feature_major.1} parent=5 // pred_check_branch
        %207 = sbr.rel (%p204) target = $region12
      $region11: #{strong_net_feature_major.1} parent=5 // pred_region
        %s208 = ssub.s32 %s16, 1
        // Predicated region
        $region13: #{strong_net_feature_major.1} parent=11 // pred_check
          %p209 = pneg %p63
        $region14: #{strong_net_feature_major.1} parent=11 // pred_check_branch
          %211 = sbr.rel (%p209) target = $region16
        $region15: #{strong_net_feature_major.1} parent=11 // pred_region
          _
        $region16: #{strong_net_feature_major.1} parent=11 // pred_fallthru
          _
        // Predicated region
        $region17: #{strong_net_feature_major.1} parent=11 // pred_check
          %p212 = pneg %p84
        $region18: #{strong_net_feature_major.1} parent=11 // pred_check_branch
          %214 = sbr.rel (%p212) target = $region20
        $region19: #{strong_net_feature_major.1} parent=11 // pred_region
          _
        $region20: #{strong_net_feature_major.1} parent=11 // pred_fallthru
          _
        // Predicated region
        $region21: #{strong_net_feature_major.1} parent=11 // pred_check
          %p215 = pneg %p105
        $region22: #{strong_net_feature_major.1} parent=11 // pred_check_branch
          %217 = sbr.rel (%p215) target = $region24
        $region23: #{strong_net_feature_major.1} parent=11 // pred_region
          _
        $region24: #{strong_net_feature_major.1} parent=11 // pred_fallthru
          _
        // Predicated region
        $region25: #{strong_net_feature_major.1} parent=11 // pred_check
          %p218 = pneg %p126
        $region26: #{strong_net_feature_major.1} parent=11 // pred_check_branch
          %220 = sbr.rel (%p218) target = $region28
        $region27: #{strong_net_feature_major.1} parent=11 // pred_region
          _
        $region28: #{strong_net_feature_major.1} parent=11 // pred_fallthru
          _
        // Predicated region
        $region29: #{strong_net_feature_major.1} parent=11 // pred_check
          %p221 = pneg %p147
        $region30: #{strong_net_feature_major.1} parent=11 // pred_check_branch
          %223 = sbr.rel (%p221) target = $region32
        $region31: #{strong_net_feature_major.1} parent=11 // pred_region
          _
        $region32: #{strong_net_feature_major.1} parent=11 // pred_fallthru
          _
        // Predicated region
        $region33: #{strong_net_feature_major.1} parent=11 // pred_check
          %p224 = pneg %p168
        $region34: #{strong_net_feature_major.1} parent=11 // pred_check_branch
          %226 = sbr.rel (%p224) target = $region36
        $region35: #{strong_net_feature_major.1} parent=11 // pred_region
          _
        $region36: #{strong_net_feature_major.1} parent=11 // pred_fallthru
          _
      $region12: #{strong_net_feature_major.1} parent=5 // pred_fallthru
        _
      %p227 = scmp.lt.s32.totalorder %s16, 4
      // Predicated region
      $region37: #{strong_net_feature_major.1} parent=5 // pred_check
        %p228 = pneg %p227
      $region38: #{strong_net_feature_major.1} parent=5 // pred_check_branch
        %230 = sbr.rel (%p228) target = $region40
      $region39: #{strong_net_feature_major.1} parent=5 // pred_region
        // Predicated region
        $region41: #{strong_net_feature_major.1} parent=39 // pred_check
          %p231 = pneg %p36
        $region42: #{strong_net_feature_major.1} parent=39 // pred_check_branch
          %233 = sbr.rel (%p231) target = $region44
        $region43: #{strong_net_feature_major.1} parent=39 // pred_region
          %s234 = smul.u32 4, %s16
          %p235 = scmp.lt.s32.totalorder %s234, 15
          %s236 = scalar_select %p235, %s234, 15
          %s237 = smul.addr %s236, 2
          %s238 = scalar_lea.vmem %s0, %s237
          %s239 = smul.u32 4, %s16
        $region44: #{strong_net_feature_major.1} parent=39 // pred_fallthru
          _
      $region40: #{strong_net_feature_major.1} parent=5 // pred_fallthru
        _
      %p240 = scmp.le.s32.totalorder 1, %s16
      %p241 = scmp.lt.s32.totalorder %s16, 5
      %p242 = pnand %p240, %p241
      %p243 = pneg %p242
      // Predicated region
      $region45: #{strong_net_feature_major.1} parent=5 // pred_check
        _
      $region46: #{strong_net_feature_major.1} parent=5 // pred_check_branch
        %245 = sbr.rel (%p242) target = $region48
      $region47: #{strong_net_feature_major.1} parent=5 // pred_region
        %s246 = ssub.s32 %s16, 1
        %s247 = smul.u32 4, %s21
        %p248 = scmp.lt.s32.totalorder %s247, 15
        %s249 = scalar_select %p248, %s247, 15
        %s250 = smul.addr %s249, 2
        %s251 = scalar_lea.vmem %s0, %s250
        %p252 = pneg %p42
        %p253 = pneg %p39
        %p254 = pneg %p63
        %p255 = pneg %p60
        %p256 = pneg %p84
        %p257 = pneg %p81
        %p258 = pneg %p105
        %p259 = pneg %p102
        %p260 = pneg %p126
        %p261 = pneg %p123
        %p262 = pneg %p147
        %p263 = pneg %p144
        %p264 = pneg %p168
        %p265 = pneg %p165
        %p266 = pneg %p194
        %p267 = pneg %p191
        %s268 = sand.u32 %s181, 1
        %s269 = scalar_lea.sflag [#allocation3], %s268
        %s270 = sand.u32 %s181, 1
        %s271 = smul.addr %s270, 32
        %s272 = scalar_lea.vmem [#allocation2], %s271
        %s273 = smul.u32 4, %s21
        %p274 = scmp.lt.s32.totalorder %s273, 15
        %s275 = scalar_select %p274, %s273, 15
        %s276 = smul.addr %s275, 2
        %s277 = scalar_lea.vmem %s0, %s276
        %s278 = smul.u32 4, %s21
        %s279 = smul.u32 4, %s21
        %v280 = vld [vmem:[%s277] ss:$2 sm:$0xf]
        %s281 = scalar_lea.vmem %s277, 1
        %v282 = vld [vmem:[%s281] ss:$2 sm:$0xf]
        %v283 = vld [vmem:[%s1] sm:$0xff]
        %v284 = vld [vmem:[%s1 + $0x8] sm:$0xff]
        %v285 = vld [vmem:[%s1 + $0x10] sm:$0xff]
        %v286 = vld [vmem:[%s1 + $0x18] sm:$0xff]
        %288 = vset.pattern.permute.xlu0 0
        %289 = vperm.xlu0 %288, %v283
        %v290 = vpop.permute.xlu0 %289
        %293 = vset.pattern.permute.xlu0 0
        %294 = vperm.xlu0 %293, %v284
        %v295 = vpop.permute.xlu0 %294
        %298 = vset.pattern.permute.xlu0 0
        %299 = vperm.xlu0 %298, %v285
        %v300 = vpop.permute.xlu0 %299
        %303 = vset.pattern.permute.xlu0 0
        %304 = vperm.xlu0 %303, %v286
        %v305 = vpop.permute.xlu0 %304
        %v308 = vlaneseq
        %v309 = vshrl.u32 %v308, 7
        %v310 = vsub.s32 0, %v309
        %v311 = vrot.slane %v280, %v310
        %v312 = vlaneseq
        %v313 = vshrl.u32 %v312, 7
        %v314 = vsub.s32 1, %v313
        %v315 = vrot.slane %v280, %v314
        %v316 = vlaneseq
        %v317 = vshrl.u32 %v316, 7
        %v318 = vsub.s32 2, %v317
        %v319 = vrot.slane %v280, %v318
        %v320 = vlaneseq
        %v321 = vshrl.u32 %v320, 7
        %v322 = vsub.s32 3, %v321
        %v323 = vrot.slane %v280, %v322
        %v328 = vmul.f32 %v290, %v311
        %v329 = vmul.f32 %v290, %v315
        %v330 = vmul.f32 %v290, %v319
        %v331 = vmul.f32 %v290, %v323
        %v332 = vmul.f32 %v295, %v311
        %v333 = vmul.f32 %v295, %v315
        %v334 = vmul.f32 %v295, %v319
        %v335 = vmul.f32 %v295, %v323
        %v336 = vmul.f32 %v300, %v311
        %v337 = vmul.f32 %v300, %v315
        %v338 = vmul.f32 %v300, %v319
        %v339 = vmul.f32 %v300, %v323
        %v340 = vmul.f32 %v305, %v311
        %v341 = vmul.f32 %v305, %v315
        %v342 = vmul.f32 %v305, %v319
        %v343 = vmul.f32 %v305, %v323
        %344 = vset.pattern.permute.xlu0 1
        %345 = vperm.xlu0 %344, %v283
        %v346 = vpop.permute.xlu0 %345
        %348 = vset.pattern.permute.xlu0 1
        %349 = vperm.xlu0 %348, %v284
        %v350 = vpop.permute.xlu0 %349
        %352 = vset.pattern.permute.xlu0 1
        %353 = vperm.xlu0 %352, %v285
        %v354 = vpop.permute.xlu0 %353
        %356 = vset.pattern.permute.xlu0 1
        %357 = vperm.xlu0 %356, %v286
        %v358 = vpop.permute.xlu0 %357
        %v361 = vlaneseq
        %v362 = vshrl.u32 %v361, 7
        %v363 = vsub.s32 0, %v362
        %v364 = vrot.slane %v282, %v363
        %v365 = vlaneseq
        %v366 = vshrl.u32 %v365, 7
        %v367 = vsub.s32 1, %v366
        %v368 = vrot.slane %v282, %v367
        %v369 = vlaneseq
        %v370 = vshrl.u32 %v369, 7
        %v371 = vsub.s32 2, %v370
        %v372 = vrot.slane %v282, %v371
        %v373 = vlaneseq
        %v374 = vshrl.u32 %v373, 7
        %v375 = vsub.s32 3, %v374
        %v376 = vrot.slane %v282, %v375
        %v381 = vmul.f32 %v346, %v364
        %v382 = vmul.f32 %v346, %v368
        %v383 = vmul.f32 %v346, %v372
        %v384 = vmul.f32 %v346, %v376
        %v385 = vmul.f32 %v350, %v364
        %v386 = vmul.f32 %v350, %v368
        %v387 = vmul.f32 %v350, %v372
        %v388 = vmul.f32 %v350, %v376
        %v389 = vmul.f32 %v354, %v364
        %v390 = vmul.f32 %v354, %v368
        %v391 = vmul.f32 %v354, %v372
        %v392 = vmul.f32 %v354, %v376
        %v393 = vmul.f32 %v358, %v364
        %v394 = vmul.f32 %v358, %v368
        %v395 = vmul.f32 %v358, %v372
        %v396 = vmul.f32 %v358, %v376
        %v397 = vadd.f32 %v328, %v381
        %v398 = vadd.f32 %v329, %v382
        %v399 = vadd.f32 %v330, %v383
        %v400 = vadd.f32 %v331, %v384
        %v401 = vadd.f32 %v332, %v385
        %v402 = vadd.f32 %v333, %v386
        %v403 = vadd.f32 %v334, %v387
        %v404 = vadd.f32 %v335, %v388
        %v405 = vadd.f32 %v336, %v389
        %v406 = vadd.f32 %v337, %v390
        %v407 = vadd.f32 %v338, %v391
        %v408 = vadd.f32 %v339, %v392
        %v409 = vadd.f32 %v340, %v393
        %v410 = vadd.f32 %v341, %v394
        %v411 = vadd.f32 %v342, %v395
        %v412 = vadd.f32 %v343, %v396
        %v413 = vld [vmem:[%s2] sm:$0xff]
        %v414 = vld [vmem:[%s2 + $0x8] sm:$0xff]
        %v415 = vld [vmem:[%s2 + $0x10] sm:$0xff]
        %v416 = vld [vmem:[%s2 + $0x18] sm:$0xff]
        %418 = vset.pattern.permute.xlu0 0
        %419 = vperm.xlu0 %418, %v413
        %v420 = vpop.permute.xlu0 %419
        %423 = vset.pattern.permute.xlu0 0
        %424 = vperm.xlu0 %423, %v414
        %v425 = vpop.permute.xlu0 %424
        %428 = vset.pattern.permute.xlu0 0
        %429 = vperm.xlu0 %428, %v415
        %v430 = vpop.permute.xlu0 %429
        %433 = vset.pattern.permute.xlu0 0
        %434 = vperm.xlu0 %433, %v416
        %v435 = vpop.permute.xlu0 %434
        %v437 = vadd.f32 %v397, %v420
        %v438 = vadd.f32 %v398, %v420
        %v439 = vadd.f32 %v399, %v420
        %v440 = vadd.f32 %v400, %v420
        %v441 = vadd.f32 %v401, %v425
        %v442 = vadd.f32 %v402, %v425
        %v443 = vadd.f32 %v403, %v425
        %v444 = vadd.f32 %v404, %v425
        %v445 = vadd.f32 %v405, %v430
        %v446 = vadd.f32 %v406, %v430
        %v447 = vadd.f32 %v407, %v430
        %v448 = vadd.f32 %v408, %v430
        %v449 = vadd.f32 %v409, %v435
        %v450 = vadd.f32 %v410, %v435
        %v451 = vadd.f32 %v411, %v435
        %v452 = vadd.f32 %v412, %v435
        %v453 = vtanh.pop %v437
        %v454 = vtanh.pop %v438
        %v455 = vtanh.pop %v439
        %v456 = vtanh.pop %v440
        %v457 = vtanh.pop %v441
        %v458 = vtanh.pop %v442
        %v459 = vtanh.pop %v443
        %v460 = vtanh.pop %v444
        %v461 = vtanh.pop %v445
        %v462 = vtanh.pop %v446
        %v463 = vtanh.pop %v447
        %v464 = vtanh.pop %v448
        %v465 = vtanh.pop %v449
        %v466 = vtanh.pop %v450
        %v467 = vtanh.pop %v451
        %v468 = vtanh.pop %v452
        %v469 = vld [vmem:[%s3] sm:$0xff]
        %v470 = vld [vmem:[%s3 + $0x8] sm:$0xff]
        %v471 = vld [vmem:[%s3 + $0x10] sm:$0xff]
        %v472 = vld [vmem:[%s3 + $0x18] sm:$0xff]
        %v473 = vld [vmem:[%s4] sm:$0xff]
        %v474 = vld [vmem:[%s4 + $0x8] sm:$0xff]
        %v475 = vld [vmem:[%s4 + $0x10] sm:$0xff]
        %v476 = vld [vmem:[%s4 + $0x18] sm:$0xff]
        %478 = vset.pattern.permute.xlu0 0
        %479 = vperm.xlu0 %478, %v473
        %v480 = vpop.permute.xlu0 %479
        %483 = vset.pattern.permute.xlu0 0
        %484 = vperm.xlu0 %483, %v474
        %v485 = vpop.permute.xlu0 %484
        %488 = vset.pattern.permute.xlu0 0
        %489 = vperm.xlu0 %488, %v475
        %v490 = vpop.permute.xlu0 %489
        %493 = vset.pattern.permute.xlu0 0
        %494 = vperm.xlu0 %493, %v476
        %v495 = vpop.permute.xlu0 %494
        %vm497 = vcmask 261120
        %v499 = vsel %vm497, %v469, 0
        %v502 = vsel %vm497, %v470, 0
        %v505 = vsel %vm497, %v471, 0
        %v508 = vsel %vm497, %v472, 0
        %510 = vmatprep.subr.mxu0 0.0
        %511 = vmatpush1.msra.mxu0 0.0
        %512 = vmatprep.subr.mxu0 0.0
        %513 = vmatpush1.msra.mxu0 0.0
        %514 = vmatprep.subr.mxu0 0.0
        %515 = vmatpush1.msra.mxu0 0.0
        %516 = vmatprep.subr.mxu0 0.0
        %517 = vmatpush1.msra.mxu0 0.0
        %518 = vmatprep.subr.mxu0 0.0
        %519 = vmatpush1.msra.mxu0 0.0
        %520 = vmatprep.subr.mxu0 0.0
        %521 = vmatpush1.msra.mxu0 0.0
        %522 = vmatprep.subr.mxu0 0.0
        %523 = vmatpush1.msra.mxu0 0.0
        %524 = vmatprep.subr.mxu0 0.0
        %525 = vmatpush1.msra.mxu0 0.0
        %526 = vmatprep.subr.mxu0 0.0
        %527 = vmatpush1.msra.mxu0 0.0
        %528 = vmatprep.subr.mxu0 0.0
        %529 = vmatpush1.msra.mxu0 0.0
        %530 = vmatprep.subr.mxu0 0.0
        %531 = vmatpush1.msra.mxu0 0.0
        %532 = vmatprep.subr.mxu0 0.0
        %533 = vmatpush1.msra.mxu0 0.0
        %534 = vmatprep.subr.mxu0 %v466
        %535 = vmatpush1.msra.mxu0 %v465
        %536 = vmatprep.subr.mxu0 %v462
        %537 = vmatpush1.msra.mxu0 %v461
        %538 = vmatprep.subr.mxu0 %v458
        %539 = vmatpush1.msra.mxu0 %v457
        %540 = vmatprep.subr.mxu0 %v454
        %541 = vmatpush1.msra.mxu0 %v453
        %542 = vmatprep.subr.mxu0 0.0
        %543 = vmatpush2.msra.mxu0 0.0
        %544 = vmatprep.subr.mxu0 0.0
        %545 = vmatpush2.msra.mxu0 0.0
        %546 = vmatprep.subr.mxu0 0.0
        %547 = vmatpush2.msra.mxu0 0.0
        %548 = vmatprep.subr.mxu0 0.0
        %549 = vmatpush2.msra.mxu0 0.0
        %550 = vmatprep.subr.mxu0 0.0
        %551 = vmatpush2.msra.mxu0 0.0
        %552 = vmatprep.subr.mxu0 0.0
        %553 = vmatpush2.msra.mxu0 0.0
        %554 = vmatprep.subr.mxu0 0.0
        %555 = vmatpush2.msra.mxu0 0.0
        %556 = vmatprep.subr.mxu0 0.0
        %557 = vmatpush2.msra.mxu0 0.0
        %558 = vmatprep.subr.mxu0 0.0
        %559 = vmatpush2.msra.mxu0 0.0
        %560 = vmatprep.subr.mxu0 0.0
        %561 = vmatpush2.msra.mxu0 0.0
        %562 = vmatprep.subr.mxu0 0.0
        %563 = vmatpush2.msra.mxu0 0.0
        %564 = vmatprep.subr.mxu0 0.0
        %565 = vmatpush2.msra.mxu0 0.0
        %566 = vmatprep.subr.mxu0 0.0
        %567 = vmatpush2.msra.mxu0 0.0
        %568 = vmatprep.subr.mxu0 0.0
        %569 = vmatpush2.msra.mxu0 0.0
        %570 = vmatprep.subr.mxu0 0.0
        %571 = vmatpush2.msra.mxu0 0.0
        %572 = vmatprep.subr.mxu0 0.0
        %573 = vmatpush2.msra.mxu0 0.0
        %574 = vmatprep.mubr.f32.mxu0 0.0
        %575 = vmatmul.mubr.f32.gmra.mxu0 %v499
        %v576 = vpop.f32.mrf.mxu0
        %v577 = vadd.f32 %v480, %v576
        %v578 = vpop.f32.mrf.mxu0
        %v579 = vadd.f32 %v480, %v578
        %580 = vmatprep.mubr.f32.mxu0 0.0
        %581 = vmatmul.mubr.f32.gmra.mxu0 %v502
        %v582 = vpop.f32.mrf.mxu0
        %v583 = vadd.f32 %v485, %v582
        %v584 = vpop.f32.mrf.mxu0
        %v585 = vadd.f32 %v485, %v584
        %586 = vmatprep.mubr.f32.mxu0 0.0
        %587 = vmatmul.mubr.f32.gmra.mxu0 %v505
        %v588 = vpop.f32.mrf.mxu0
        %v589 = vadd.f32 %v490, %v588
        %v590 = vpop.f32.mrf.mxu0
        %v591 = vadd.f32 %v490, %v590
        %592 = vmatprep.mubr.f32.mxu0 0.0
        %593 = vmatmul.mubr.f32.gmra.mxu0 %v508
        %v594 = vpop.f32.mrf.mxu0
        %v595 = vadd.f32 %v495, %v594
        %v596 = vpop.f32.mrf.mxu0
        %v597 = vadd.f32 %v495, %v596
        %598 = vdwg.mxu0
        %599 = vmatprep.subr.mxu0 0.0
        %600 = vmatpush1.msra.mxu0 0.0
        %601 = vmatprep.subr.mxu0 0.0
        %602 = vmatpush1.msra.mxu0 0.0
        %603 = vmatprep.subr.mxu0 0.0
        %604 = vmatpush1.msra.mxu0 0.0
        %605 = vmatprep.subr.mxu0 0.0
        %606 = vmatpush1.msra.mxu0 0.0
        %607 = vmatprep.subr.mxu0 0.0
        %608 = vmatpush1.msra.mxu0 0.0
        %609 = vmatprep.subr.mxu0 0.0
        %610 = vmatpush1.msra.mxu0 0.0
        %611 = vmatprep.subr.mxu0 0.0
        %612 = vmatpush1.msra.mxu0 0.0
        %613 = vmatprep.subr.mxu0 0.0
        %614 = vmatpush1.msra.mxu0 0.0
        %615 = vmatprep.subr.mxu0 0.0
        %616 = vmatpush1.msra.mxu0 0.0
        %617 = vmatprep.subr.mxu0 0.0
        %618 = vmatpush1.msra.mxu0 0.0
        %619 = vmatprep.subr.mxu0 0.0
        %620 = vmatpush1.msra.mxu0 0.0
        %621 = vmatprep.subr.mxu0 0.0
        %622 = vmatpush1.msra.mxu0 0.0
        %623 = vmatprep.subr.mxu0 %v468
        %624 = vmatpush1.msra.mxu0 %v467
        %625 = vmatprep.subr.mxu0 %v464
        %626 = vmatpush1.msra.mxu0 %v463
        %627 = vmatprep.subr.mxu0 %v460
        %628 = vmatpush1.msra.mxu0 %v459
        %629 = vmatprep.subr.mxu0 %v456
        %630 = vmatpush1.msra.mxu0 %v455
        %631 = vmatprep.subr.mxu0 0.0
        %632 = vmatpush2.msra.mxu0 0.0
        %633 = vmatprep.subr.mxu0 0.0
        %634 = vmatpush2.msra.mxu0 0.0
        %635 = vmatprep.subr.mxu0 0.0
        %636 = vmatpush2.msra.mxu0 0.0
        %637 = vmatprep.subr.mxu0 0.0
        %638 = vmatpush2.msra.mxu0 0.0
        %639 = vmatprep.subr.mxu0 0.0
        %640 = vmatpush2.msra.mxu0 0.0
        %641 = vmatprep.subr.mxu0 0.0
        %642 = vmatpush2.msra.mxu0 0.0
        %643 = vmatprep.subr.mxu0 0.0
        %644 = vmatpush2.msra.mxu0 0.0
        %645 = vmatprep.subr.mxu0 0.0
        %646 = vmatpush2.msra.mxu0 0.0
        %647 = vmatprep.subr.mxu0 0.0
        %648 = vmatpush2.msra.mxu0 0.0
        %649 = vmatprep.subr.mxu0 0.0
        %650 = vmatpush2.msra.mxu0 0.0
        %651 = vmatprep.subr.mxu0 0.0
        %652 = vmatpush2.msra.mxu0 0.0
        %653 = vmatprep.subr.mxu0 0.0
        %654 = vmatpush2.msra.mxu0 0.0
        %655 = vmatprep.subr.mxu0 0.0
        %656 = vmatpush2.msra.mxu0 0.0
        %657 = vmatprep.subr.mxu0 0.0
        %658 = vmatpush2.msra.mxu0 0.0
        %659 = vmatprep.subr.mxu0 0.0
        %660 = vmatpush2.msra.mxu0 0.0
        %661 = vmatprep.subr.mxu0 0.0
        %662 = vmatpush2.msra.mxu0 0.0
        %663 = vmatprep.mubr.f32.mxu0 0.0
        %664 = vmatmul.mubr.f32.gmra.mxu0 %v499
        %v665 = vpop.f32.mrf.mxu0
        %v666 = vadd.f32 %v480, %v665
        %v667 = vpop.f32.mrf.mxu0
        %v668 = vadd.f32 %v480, %v667
        %669 = vmatprep.mubr.f32.mxu0 0.0
        %670 = vmatmul.mubr.f32.gmra.mxu0 %v502
        %v671 = vpop.f32.mrf.mxu0
        %v672 = vadd.f32 %v485, %v671
        %v673 = vpop.f32.mrf.mxu0
        %v674 = vadd.f32 %v485, %v673
        %675 = vmatprep.mubr.f32.mxu0 0.0
        %676 = vmatmul.mubr.f32.gmra.mxu0 %v505
        %v677 = vpop.f32.mrf.mxu0
        %v678 = vadd.f32 %v490, %v677
        %v679 = vpop.f32.mrf.mxu0
        %v680 = vadd.f32 %v490, %v679
        %681 = vmatprep.mubr.f32.mxu0 0.0
        %682 = vmatmul.mubr.f32.gmra.mxu0 %v508
        %v683 = vpop.f32.mrf.mxu0
        %v684 = vadd.f32 %v495, %v683
        %v685 = vpop.f32.mrf.mxu0
        %v686 = vadd.f32 %v495, %v685
        %687 = vdwg.mxu0
        %v688 = vtanh.pop %v577
        %v689 = vtanh.pop %v579
        %v690 = vtanh.pop %v666
        %v691 = vtanh.pop %v668
        %v692 = vtanh.pop %v583
        %v693 = vtanh.pop %v585
        %v694 = vtanh.pop %v672
        %v695 = vtanh.pop %v674
        %v696 = vtanh.pop %v589
        %v697 = vtanh.pop %v591
        %v698 = vtanh.pop %v678
        %v699 = vtanh.pop %v680
        %v700 = vtanh.pop %v595
        %v701 = vtanh.pop %v597
        %v702 = vtanh.pop %v684
        %v703 = vtanh.pop %v686
        %v704 = vld [vmem:[%s5] sm:$0xff]
        %v705 = vld [vmem:[%s6] sm:$0xff]
        %707 = vset.pattern.permute.xlu0 0
        %708 = vperm.xlu0 %707, %v705
        %v709 = vpop.permute.xlu0 %708
        %v712 = vsel %vm497, %v704, 0
        %714 = vmatprep.subr.mxu0 0.0
        %715 = vmatpush1.msra.mxu0 0.0
        %716 = vmatprep.subr.mxu0 0.0
        %717 = vmatpush1.msra.mxu0 0.0
        %718 = vmatprep.subr.mxu0 0.0
        %719 = vmatpush1.msra.mxu0 0.0
        %720 = vmatprep.subr.mxu0 0.0
        %721 = vmatpush1.msra.mxu0 0.0
        %722 = vmatprep.subr.mxu0 0.0
        %723 = vmatpush1.msra.mxu0 0.0
        %724 = vmatprep.subr.mxu0 0.0
        %725 = vmatpush1.msra.mxu0 0.0
        %726 = vmatprep.subr.mxu0 0.0
        %727 = vmatpush1.msra.mxu0 0.0
        %728 = vmatprep.subr.mxu0 0.0
        %729 = vmatpush1.msra.mxu0 0.0
        %730 = vmatprep.subr.mxu0 0.0
        %731 = vmatpush1.msra.mxu0 0.0
        %732 = vmatprep.subr.mxu0 0.0
        %733 = vmatpush1.msra.mxu0 0.0
        %734 = vmatprep.subr.mxu0 0.0
        %735 = vmatpush1.msra.mxu0 0.0
        %736 = vmatprep.subr.mxu0 0.0
        %737 = vmatpush1.msra.mxu0 0.0
        %738 = vmatprep.subr.mxu0 %v701
        %739 = vmatpush1.msra.mxu0 %v700
        %740 = vmatprep.subr.mxu0 %v697
        %741 = vmatpush1.msra.mxu0 %v696
        %742 = vmatprep.subr.mxu0 %v693
        %743 = vmatpush1.msra.mxu0 %v692
        %744 = vmatprep.subr.mxu0 %v689
        %745 = vmatpush1.msra.mxu0 %v688
        %746 = vmatprep.subr.mxu0 0.0
        %747 = vmatpush2.msra.mxu0 0.0
        %748 = vmatprep.subr.mxu0 0.0
        %749 = vmatpush2.msra.mxu0 0.0
        %750 = vmatprep.subr.mxu0 0.0
        %751 = vmatpush2.msra.mxu0 0.0
        %752 = vmatprep.subr.mxu0 0.0
        %753 = vmatpush2.msra.mxu0 0.0
        %754 = vmatprep.subr.mxu0 0.0
        %755 = vmatpush2.msra.mxu0 0.0
        %756 = vmatprep.subr.mxu0 0.0
        %757 = vmatpush2.msra.mxu0 0.0
        %758 = vmatprep.subr.mxu0 0.0
        %759 = vmatpush2.msra.mxu0 0.0
        %760 = vmatprep.subr.mxu0 0.0
        %761 = vmatpush2.msra.mxu0 0.0
        %762 = vmatprep.subr.mxu0 0.0
        %763 = vmatpush2.msra.mxu0 0.0
        %764 = vmatprep.subr.mxu0 0.0
        %765 = vmatpush2.msra.mxu0 0.0
        %766 = vmatprep.subr.mxu0 0.0
        %767 = vmatpush2.msra.mxu0 0.0
        %768 = vmatprep.subr.mxu0 0.0
        %769 = vmatpush2.msra.mxu0 0.0
        %770 = vmatprep.subr.mxu0 0.0
        %771 = vmatpush2.msra.mxu0 0.0
        %772 = vmatprep.subr.mxu0 0.0
        %773 = vmatpush2.msra.mxu0 0.0
        %774 = vmatprep.subr.mxu0 0.0
        %775 = vmatpush2.msra.mxu0 0.0
        %776 = vmatprep.subr.mxu0 0.0
        %777 = vmatpush2.msra.mxu0 0.0
        %778 = vmatprep.mubr.f32.mxu0 0.0
        %779 = vmatmul.mubr.f32.gmra.mxu0 %v712
        %v780 = vpop.f32.mrf.mxu0
        %v781 = vadd.f32 %v709, %v780
        %v782 = vpop.f32.mrf.mxu0
        %v783 = vadd.f32 %v709, %v782
        %784 = vdwg.mxu0
        %785 = vmatprep.subr.mxu0 0.0
        %786 = vmatpush1.msra.mxu0 0.0
        %787 = vmatprep.subr.mxu0 0.0
        %788 = vmatpush1.msra.mxu0 0.0
        %789 = vmatprep.subr.mxu0 0.0
        %790 = vmatpush1.msra.mxu0 0.0
        %791 = vmatprep.subr.mxu0 0.0
        %792 = vmatpush1.msra.mxu0 0.0
        %793 = vmatprep.subr.mxu0 0.0
        %794 = vmatpush1.msra.mxu0 0.0
        %795 = vmatprep.subr.mxu0 0.0
        %796 = vmatpush1.msra.mxu0 0.0
        %797 = vmatprep.subr.mxu0 0.0
        %798 = vmatpush1.msra.mxu0 0.0
        %799 = vmatprep.subr.mxu0 0.0
        %800 = vmatpush1.msra.mxu0 0.0
        %801 = vmatprep.subr.mxu0 0.0
        %802 = vmatpush1.msra.mxu0 0.0
        %803 = vmatprep.subr.mxu0 0.0
        %804 = vmatpush1.msra.mxu0 0.0
        %805 = vmatprep.subr.mxu0 0.0
        %806 = vmatpush1.msra.mxu0 0.0
        %807 = vmatprep.subr.mxu0 0.0
        %808 = vmatpush1.msra.mxu0 0.0
        %809 = vmatprep.subr.mxu0 %v703
        %810 = vmatpush1.msra.mxu0 %v702
        %811 = vmatprep.subr.mxu0 %v699
        %812 = vmatpush1.msra.mxu0 %v698
        %813 = vmatprep.subr.mxu0 %v695
        %814 = vmatpush1.msra.mxu0 %v694
        %815 = vmatprep.subr.mxu0 %v691
        %816 = vmatpush1.msra.mxu0 %v690
        %817 = vmatprep.subr.mxu0 0.0
        %818 = vmatpush2.msra.mxu0 0.0
        %819 = vmatprep.subr.mxu0 0.0
        %820 = vmatpush2.msra.mxu0 0.0
        %821 = vmatprep.subr.mxu0 0.0
        %822 = vmatpush2.msra.mxu0 0.0
        %823 = vmatprep.subr.mxu0 0.0
        %824 = vmatpush2.msra.mxu0 0.0
        %825 = vmatprep.subr.mxu0 0.0
        %826 = vmatpush2.msra.mxu0 0.0
        %827 = vmatprep.subr.mxu0 0.0
        %828 = vmatpush2.msra.mxu0 0.0
        %829 = vmatprep.subr.mxu0 0.0
        %830 = vmatpush2.msra.mxu0 0.0
        %831 = vmatprep.subr.mxu0 0.0
        %832 = vmatpush2.msra.mxu0 0.0
        %833 = vmatprep.subr.mxu0 0.0
        %834 = vmatpush2.msra.mxu0 0.0
        %835 = vmatprep.subr.mxu0 0.0
        %836 = vmatpush2.msra.mxu0 0.0
        %837 = vmatprep.subr.mxu0 0.0
        %838 = vmatpush2.msra.mxu0 0.0
        %839 = vmatprep.subr.mxu0 0.0
        %840 = vmatpush2.msra.mxu0 0.0
        %841 = vmatprep.subr.mxu0 0.0
        %842 = vmatpush2.msra.mxu0 0.0
        %843 = vmatprep.subr.mxu0 0.0
        %844 = vmatpush2.msra.mxu0 0.0
        %845 = vmatprep.subr.mxu0 0.0
        %846 = vmatpush2.msra.mxu0 0.0
        %847 = vmatprep.subr.mxu0 0.0
        %848 = vmatpush2.msra.mxu0 0.0
        %849 = vmatprep.mubr.f32.mxu0 0.0
        %850 = vmatmul.mubr.f32.gmra.mxu0 %v712
        %v851 = vpop.f32.mrf.mxu0
        %v852 = vadd.f32 %v709, %v851
        %v853 = vpop.f32.mrf.mxu0
        %v854 = vadd.f32 %v709, %v853
        %855 = vdwg.mxu0
        %v856 = vsub.f32 2.0, %v282
        %v857 = vmul.f32 %v856, %v280
        %v858 = vmul.f32 %v857, %v282
        %v859 = vsub.f32 1.0, %v280
        %v860 = vmul.f32 %v858, %v859
        %v862 = vlaneseq
        %v863 = vshrl.u32 %v862, 7
        %v864 = vsub.s32 0, %v863
        %v865 = vrot.slane %v858, %v864
        %v866 = vlaneseq
        %v867 = vshrl.u32 %v866, 7
        %v868 = vsub.s32 1, %v867
        %v869 = vrot.slane %v858, %v868
        %v870 = vlaneseq
        %v871 = vshrl.u32 %v870, 7
        %v872 = vsub.s32 2, %v871
        %v873 = vrot.slane %v858, %v872
        %v874 = vlaneseq
        %v875 = vshrl.u32 %v874, 7
        %v876 = vsub.s32 3, %v875
        %v877 = vrot.slane %v858, %v876
        %v883 = vlaneseq
        %v884 = vshrl.u32 %v883, 7
        %v885 = vsub.s32 0, %v884
        %v886 = vrot.slane %v860, %v885
        %v887 = vlaneseq
        %v888 = vshrl.u32 %v887, 7
        %v889 = vsub.s32 1, %v888
        %v890 = vrot.slane %v860, %v889
        %v891 = vlaneseq
        %v892 = vshrl.u32 %v891, 7
        %v893 = vsub.s32 2, %v892
        %v894 = vrot.slane %v860, %v893
        %v895 = vlaneseq
        %v896 = vshrl.u32 %v895, 7
        %v897 = vsub.s32 3, %v896
        %v898 = vrot.slane %v860, %v897
        %vm903 = vcmask 1040384
        %v904 = vsel %vm903, %v865, %v886
        %v905 = vsel %vm903, %v869, %v890
        %v906 = vsel %vm903, %v873, %v894
        %v907 = vsel %vm903, %v877, %v898
        %vm908 = vcmask 1041408
        %v909 = vsel %vm908, %v904, 1.0
        %v910 = vsel %vm908, %v905, 1.0
        %v911 = vsel %vm908, %v906, 1.0
        %v912 = vsel %vm908, %v907, 1.0
        %vm913 = vcmask 1042432
        %v914 = vsel %vm913, %v909, %v865
        %v915 = vsel %vm913, %v910, %v869
        %v916 = vsel %vm913, %v911, %v873
        %v917 = vsel %vm913, %v912, %v877
        %vm918 = vcmask 1043456
        %v919 = vsel %vm918, %v914, %v886
        %v920 = vsel %vm918, %v915, %v890
        %v921 = vsel %vm918, %v916, %v894
        %v922 = vsel %vm918, %v917, %v898
        %vm923 = vcmask 1044480
        %v924 = vsel %vm923, %v919, 1.0
        %v925 = vsel %vm923, %v920, 1.0
        %v926 = vsel %vm923, %v921, 1.0
        %v927 = vsel %vm923, %v922, 1.0
        %vm928 = vcmask 1045504
        %v929 = vsel %vm928, %v924, %v865
        %v930 = vsel %vm928, %v925, %v869
        %v931 = vsel %vm928, %v926, %v873
        %v932 = vsel %vm928, %v927, %v877
        %vm933 = vcmask 1046528
        %v934 = vsel %vm933, %v929, %v886
        %v935 = vsel %vm933, %v930, %v890
        %v936 = vsel %vm933, %v931, %v894
        %v937 = vsel %vm933, %v932, %v898
        %v938 = vsel %vm903, %v364, 0.0
        %v939 = vsel %vm903, %v368, 0.0
        %v940 = vsel %vm903, %v372, 0.0
        %v941 = vsel %vm903, %v376, 0.0
        %v942 = vsel %vm908, %v938, 0.0
        %v943 = vsel %vm908, %v939, 0.0
        %v944 = vsel %vm908, %v940, 0.0
        %v945 = vsel %vm908, %v941, 0.0
        %v946 = vsel %vm913, %v942, 0.0
        %v947 = vsel %vm913, %v943, 0.0
        %v948 = vsel %vm913, %v944, 0.0
        %v949 = vsel %vm913, %v945, 0.0
        %v950 = vsel %vm918, %v946, 0.0
        %v951 = vsel %vm918, %v947, 0.0
        %v952 = vsel %vm918, %v948, 0.0
        %v953 = vsel %vm918, %v949, 0.0
        %v954 = vsel %vm923, %v950, 0.0
        %v955 = vsel %vm923, %v951, 0.0
        %v956 = vsel %vm923, %v952, 0.0
        %v957 = vsel %vm923, %v953, 0.0
        %v958 = vsel %vm928, %v954, 0.0
        %v959 = vsel %vm928, %v955, 0.0
        %v960 = vsel %vm928, %v956, 0.0
        %v961 = vsel %vm928, %v957, 0.0
        %v962 = vsel %vm933, %v958, 0.0
        %v963 = vsel %vm933, %v959, 0.0
        %v964 = vsel %vm933, %v960, 0.0
        %v965 = vsel %vm933, %v961, 0.0
        %v966 = vmul.f32 %v781, %v934
        %v967 = vmul.f32 %v783, %v935
        %v968 = vmul.f32 %v852, %v936
        %v969 = vmul.f32 %v854, %v937
        %v970 = vadd.f32 %v966, %v962
        %v971 = vadd.f32 %v967, %v963
        %v972 = vadd.f32 %v968, %v964
        %v973 = vadd.f32 %v969, %v965
        %974 = vst [vmem:[%s272] sm:$0xff] %v970
        %975 = vst [vmem:[%s272 + $0x8] sm:$0xff] %v971
        %976 = vst [vmem:[%s272 + $0x10] sm:$0xff] %v972
        %977 = vst [vmem:[%s272 + $0x18] sm:$0xff] %v973
        %s978 = sand.u32 %s181, 1
        %s979 = scalar_lea.sflag [#allocation3], %s978
        %s980 = sand.u32 %s181, 1
        %s981 = smul.addr %s980, 32
        %s982 = scalar_lea.vmem [#allocation2], %s981
        // Predicated region
        $region49: #{strong_net_feature_major.1} parent=47 // pred_check
          %p983 = pneg %p191
        $region50: #{strong_net_feature_major.1} parent=47 // pred_check_branch
          %985 = sbr.rel (%p983) target = $region52
        $region51: #{strong_net_feature_major.1} parent=47 // pred_region
          %s986 = smul.u32 4, %s21
          %s988 = ssub.s32 512, 512
          %989 = vsyncadd %s979, %s988
          %s990 = smul.addr %s986, 128
          %s991 = scalar_lea.hbm %s7, %s990
          %s993 = sshll.u32 %s982, 4
          %s994 = int_to_ptr.vmem [resolvable:$true] %s993
          %996 = dma.vmem_to_hbm [thread:$0]  %s994, 512, %s991, %s979
        $region52: #{strong_net_feature_major.1} parent=47 // pred_fallthru
          _
      $region48: #{strong_net_feature_major.1} parent=5 // pred_fallthru
        _
      %p997 = scmp.le.s32.totalorder 2, %s16
      // Predicated region
      $region53: #{strong_net_feature_major.1} parent=5 // pred_check
        %p998 = pneg %p997
      $region54: #{strong_net_feature_major.1} parent=5 // pred_check_branch
        %1000 = sbr.rel (%p998) target = $region56
      $region55: #{strong_net_feature_major.1} parent=5 // pred_region
        %s1001 = ssub.s32 %s16, 2
        // Predicated region
        $region57: #{strong_net_feature_major.1} parent=55 // pred_check
          %p1002 = pneg %p197
        $region58: #{strong_net_feature_major.1} parent=55 // pred_check_branch
          %1004 = sbr.rel (%p1002) target = $region60
        $region59: #{strong_net_feature_major.1} parent=55 // pred_region
          %s1005 = sand.u32 %s182, 1
          %s1006 = scalar_lea.sflag [#allocation3], %s1005
          %s1007 = sand.u32 %s182, 1
          %s1008 = smul.addr %s1007, 32
          %s1009 = scalar_lea.vmem [#allocation2], %s1008
          %1010 = dma.done %s1006, 512
        $region60: #{strong_net_feature_major.1} parent=55 // pred_fallthru
          _
      $region56: #{strong_net_feature_major.1} parent=5 // pred_fallthru
        _
    $region6: #{strong_net_feature_major.1} parent=1 // loop_footer
      %s20 = sadd.s32 1, %s16
    $region7: #{strong_net_feature_major.1} parent=1 // loop_footer_branch
      %15 = sbr.rel target = $region3
    $region8: #{strong_net_feature_major.1} parent=1 // loop_exit
      _
    %1011 = vsyncpa [#allocation3], 1
    %s1012 = scalar_lea.sflag [#allocation3], 1
    %1013 = vsyncpa %s1012, 1

</llo_original>
